<compile_context>
chip_gen: v5e
topology: v5e:2x2
jax: 0.10.0
libtpu: 0.0.40
codegen_flags: <defaults>
</compile_context>

<pallas_src>
import math

import jax
import jax.numpy as jnp
from jax.experimental import pallas as pl
from jax.experimental.pallas import tpu as pltpu

_LANES = 128
_SUBLANES = 8


def _round_up(v, m):
    return (v + m - 1) // m * m


def _kernel(x_ref, noise_ref, o_ref):
    # x_ref / o_ref: (nb, tm, 128) blocks in the original dtype.
    # noise_ref:     (tm, 128) f32 block, shared across the batch
    #                (its index_map ignores the batch grid index).
    scale = 1.0 + noise_ref[...]                       # once per noise element
    x = x_ref[...].astype(jnp.float32)
    o_ref[...] = (x * scale[None, :, :]).astype(o_ref.dtype)


def feature_noise(x, key, uniform_range=0.3,
                  vmem_budget_bytes=16 * 1024 * 1024, max_tm=1024):
    """x: (N, *feature_dims). Returns x * noise + x, noise shared over the batch."""
    n = x.shape[0]
    feat_shape = x.shape[1:]
    flat_len = math.prod(feat_shape)
    orig_dtype = x.dtype
    itemsize = jnp.dtype(orig_dtype).itemsize

    # Lane-dense layout: flatten the feature dims onto (rows, 128).
    if flat_len % _LANES == 0:
        rows = flat_len // _LANES
        pad_cols = 0
        x3 = x.reshape(n, rows, _LANES)
    else:
        # TODO(synk): ragged tail materializes a padded copy; common conv feature
        # sizes hit the no-pad fast path above.
        rows = pl.cdiv(flat_len, _LANES)
        pad_cols = rows * _LANES - flat_len
        x3 = jnp.pad(x.reshape(n, flat_len),
                     ((0, 0), (0, pad_cols))).reshape(n, rows, _LANES)

    # Feature-shaped noise, f32, shared over the batch (reference's unsqueeze(0)).
    noise = jax.random.uniform(key, (rows, _LANES), jnp.float32,
                               minval=-uniform_range, maxval=uniform_range)

    # Batch tiling keeps contiguous DMA chunks and bounds VMEM for large N.
    nb = min(n, 8)
    grid_b = pl.cdiv(n, nb)

    # Row tile: largest multiple-of-8 block fitting the VMEM budget
    # (double-buffered x/out in orig dtype + double-buffered f32 noise + f32 temps).
    if rows % _SUBLANES != 0:
        tm = rows                                    # full-extent block (rare)
    else:
        per_row = _LANES * (2 * 2 * nb * itemsize + 2 * 4 + 3 * nb * 4)
        tm = vmem_budget_bytes // per_row
        tm = max(_SUBLANES, min(max_tm, (tm // _SUBLANES) * _SUBLANES, rows))
        # Give v7x's 2 TensorCores at least two row blocks when there is work.
        if grid_b == 1 and tm == rows and rows >= 2 * _SUBLANES:
            tm = _round_up(pl.cdiv(rows, 2), _SUBLANES)
    grid_r = pl.cdiv(rows, tm)

    out = pl.pallas_call(
        _kernel,
        out_shape=jax.ShapeDtypeStruct((n, rows, _LANES), orig_dtype),
        grid_spec=pl.GridSpec(
            grid=(grid_b, grid_r),
            in_specs=[
                pl.BlockSpec((nb, tm, _LANES), lambda b, r: (b, r, 0)),
                pl.BlockSpec((tm, _LANES), lambda b, r: (r, 0)),
            ],
            out_specs=pl.BlockSpec((nb, tm, _LANES), lambda b, r: (b, r, 0)),
        ),
        compiler_params=pltpu.CompilerParams(
            dimension_semantics=("parallel", "parallel"),
            vmem_limit_bytes=32 * 1024 * 1024,      # safe on v5e/v6e/v7x
        ),
        cost_estimate=pl.CostEstimate(
            flops=2 * n * rows * _LANES,
            transcendentals=0,
            bytes_accessed=2 * n * rows * _LANES * itemsize + rows * _LANES * 4,
        ),
    )(x3, noise)

    if pad_cols:
        out = out.reshape(n, rows * _LANES)[:, :flat_len]
    return out.reshape((n,) + feat_shape)


if __name__ == "__main__":
    key = jax.random.PRNGKey(0)
    kx, knoise = jax.random.split(key)
    x = jax.random.normal(kx, (2, 4, 16, 16), jnp.float32)   # NCHW feature map

    out = feature_noise(x, knoise, uniform_range=0.3)
    out = jax.block_until_ready(out)

    assert out.shape == x.shape, out.shape
    assert out.dtype == x.dtype, out.dtype
    # noise in [-0.3, 0.3): |out - x| <= 0.3 * |x|
    assert bool(jnp.all(jnp.abs(out - x) <= 0.3 * jnp.abs(x) + 1e-5))
    # noise vector shared across the batch (unsqueeze(0)):
    # out[k] = x[k] * (1 + noise)  =>  out[0] * x[1] == out[1] * x[0]
    assert bool(jnp.allclose(out[0] * x[1], out[1] * x[0], rtol=1e-4, atol=1e-4))
    print("KERNEL_OK")
</pallas_src>

<mosaic_0001>
module attributes {stable_mosaic.version = 11 : i64} {
  func.func @_kernel(%arg0: i32, %arg1: i32, %arg2: memref<2x8x128xf32, #tpu.memory_space<vmem>>, %arg3: memref<8x128xf32, #tpu.memory_space<vmem>>, %arg4: memref<2x8x128xf32, #tpu.memory_space<vmem>>) attributes {dimension_semantics = [#tpu.dimension_semantics<parallel>, #tpu.dimension_semantics<parallel>], iteration_bounds = array<i64: 1, 1>, scalar_prefetch = 0 : i64, scratch_operands = 0 : i64, tpu.core_type = #tpu.core_type<tc>, window_params = [{transform_indices = @transform_0, window_bounds = array<i64: 2, 8, 128>}, {transform_indices = @transform_1, window_bounds = array<i64: 8, 128>}, {transform_indices = @transform_2, window_bounds = array<i64: 2, 8, 128>}]} {
    %c0 = arith.constant 0 : index
    %c0_0 = arith.constant 0 : index
    %0 = vector.load %arg3[%c0, %c0_0] : memref<8x128xf32, #tpu.memory_space<vmem>>, vector<8x128xf32>
    %cst = arith.constant 1.000000e+00 : f32
    %1 = vector.broadcast %cst : f32 to vector<8x128xf32>
    %2 = arith.addf %1, %0 : vector<8x128xf32>
    %c0_1 = arith.constant 0 : index
    %c0_2 = arith.constant 0 : index
    %c0_3 = arith.constant 0 : index
    %3 = vector.load %arg2[%c0_1, %c0_2, %c0_3] : memref<2x8x128xf32, #tpu.memory_space<vmem>>, vector<2x8x128xf32>
    %4 = vector.shape_cast %2 : vector<8x128xf32> to vector<1x8x128xf32>
    %5 = vector.broadcast %4 : vector<1x8x128xf32> to vector<2x8x128xf32>
    %6 = arith.mulf %3, %5 : vector<2x8x128xf32>
    %c0_4 = arith.constant 0 : index
    %c0_5 = arith.constant 0 : index
    %c0_6 = arith.constant 0 : index
    %7 = vector.load %arg4[%c0_4, %c0_5, %c0_6] : memref<2x8x128xf32, #tpu.memory_space<vmem>>, vector<2x8x128xf32>
    tpu.vector_store %arg4[%c0_4, %c0_5, %c0_6], %6 {strides = array<i32>} : memref<2x8x128xf32, #tpu.memory_space<vmem>>, vector<2x8x128xf32>,
    return
  }
  func.func @transform_0(%arg0: i32, %arg1: i32) -> (i32, i32, i32) {
    %c0_i32 = arith.constant 0 : i32
    %c0_i32_0 = arith.constant 0 : i32
    return %arg0, %arg1, %c0_i32 : i32, i32, i32
  }
  func.func @transform_1(%arg0: i32, %arg1: i32) -> (i32, i32) {
    %c0_i32 = arith.constant 0 : i32
    %c0_i32_0 = arith.constant 0 : i32
    return %arg1, %c0_i32 : i32, i32
  }
  func.func @transform_2(%arg0: i32, %arg1: i32) -> (i32, i32, i32) {
    %c0_i32 = arith.constant 0 : i32
    %c0_i32_0 = arith.constant 0 : i32
    return %arg0, %arg1, %c0_i32 : i32, i32, i32
  }
}

</mosaic_0001>

<llo_original>
// kernel: tpu_custom_call.1
$region0: #{tpu_custom_call.1}
  #allocation0 [shape = 'u32[]', space=smem, size = 0x4, offset = 0x4, fixed_abs, tag = 'smem constant byte address 0x4 - core index']
  #allocation1 [shape = 'u32[72,128]{1,0:T(1,128)}', space=vmem, size = 0x9000, scoped, tag = 'internal scratch']
  %s0 = inlined_call_operand.hbm [shape: f32[2,8,128], index: 0, kind: input, shape index: {}]
  %s1 = inlined_call_operand.hbm [shape: f32[8,128], index: 1, kind: input, shape index: {}]
  %s2 = inlined_call_operand.hbm [shape: f32[2,8,128], index: 2, kind: output, shape index: {}]
  %s3 = sld [smem:[#allocation0]]
  $region26: #{tpu_custom_call.1} parent=0
    _
  %s5 = ssub.s32 1, %s3
  %s6 = scalar_select 0, %s5, %s3
  $region1: #{tpu_custom_call.1} parent=0
    #allocation2 [shape = 'u8[8192]{0}', space=vmem, size = 0x2000, scoped, tag = 'input window, operand 0, single buffered']
    #allocation3 [shape = 's32[1]{0}', space=sflag, size = 0x4, scoped, tag = 'scoped memory for tpu_custom_call.1']
    #allocation4 [shape = 's32[1]{0}', space=sflag, size = 0x4, scoped, tag = 'scoped memory for tpu_custom_call.1']
    #allocation5 [shape = 'u8[4096]{0}', space=vmem, size = 0x1000, scoped, tag = 'input window, operand 1, single buffered']
    #allocation6 [shape = 's32[1]{0}', space=sflag, size = 0x4, scoped, tag = 'scoped memory for tpu_custom_call.1']
    #allocation7 [shape = 'u8[8192]{0}', space=vmem, size = 0x2000, scoped, tag = 'output window, operand 0, single buffered']
    %7 = vsyncpa [#allocation3], 0
    %8 = vsyncpa [#allocation6], 0
    %9 = vsyncpa [#allocation4], 0
    // Predicated region
    $region2: #{tpu_custom_call.1} parent=1 // pred_check
      _
    $region3: #{tpu_custom_call.1} parent=1 // pred_check_branch
      %11 = sbr.rel (0) target = $region5
    $region4: #{tpu_custom_call.1} parent=1 // pred_region
      %13 = vsyncadd [#allocation3], 0
      %s14 = sshll.u32 %s0, 4
      %s15 = int_to_ptr.hbm [resolvable:$true] %s14
      %s16 = sshll.u32 [#allocation2], 4
      %s17 = int_to_ptr.vmem [resolvable:$true] %s16
      %22 = dma.hbm_to_vmem [thread:$0]  %s15, 256, %s17, [#allocation3], 128, 128, 8
    $region5: #{tpu_custom_call.1} parent=1 // pred_fallthru
      _
    // Predicated region
    $region6: #{tpu_custom_call.1} parent=1 // pred_check
      _
    $region7: #{tpu_custom_call.1} parent=1 // pred_check_branch
      %24 = sbr.rel (0) target = $region9
    $region8: #{tpu_custom_call.1} parent=1 // pred_region
      %26 = vsyncadd [#allocation6], 0
      %s28 = sshll.u32 %s1, 4
      %s29 = int_to_ptr.hbm [resolvable:$true] %s28
      %s30 = sshll.u32 [#allocation5], 4
      %s31 = int_to_ptr.vmem [resolvable:$true] %s30
      %33 = dma.hbm_to_vmem [thread:$0]  %s29, 128, %s31, [#allocation6]
    $region9: #{tpu_custom_call.1} parent=1 // pred_fallthru
      _
    // Predicated region
    $region10: #{tpu_custom_call.1} parent=1 // pred_check
      _
    $region11: #{tpu_custom_call.1} parent=1 // pred_check_branch
      %35 = sbr.rel (0) target = $region13
    $region12: #{tpu_custom_call.1} parent=1 // pred_region
      %37 = dma.done [#allocation3], 256
    $region13: #{tpu_custom_call.1} parent=1 // pred_fallthru
      _
    // Predicated region
    $region14: #{tpu_custom_call.1} parent=1 // pred_check
      _
    $region15: #{tpu_custom_call.1} parent=1 // pred_check_branch
      %39 = sbr.rel (0) target = $region17
    $region16: #{tpu_custom_call.1} parent=1 // pred_region
      %41 = dma.done [#allocation6], 128
    $region17: #{tpu_custom_call.1} parent=1 // pred_fallthru
      _
    %v42 = vld [vmem:[#allocation5] sm:$0xff]
    %v43 = vadd.f32 %v42, 1.0
    %v44 = vld [vmem:[#allocation2] sm:$0xff]
    %v45 = vld [vmem:[#allocation2 + $0x8] sm:$0xff]
    %v46 = vmul.f32 %v44, %v43
    %v47 = vmul.f32 %v45, %v43
    %48 = vst [vmem:[#allocation7] sm:$0xff] %v46
    %49 = vst [vmem:[#allocation7 + $0x8] sm:$0xff] %v47
    // Predicated region
    $region18: #{tpu_custom_call.1} parent=1 // pred_check
      _
    $region19: #{tpu_custom_call.1} parent=1 // pred_check_branch
      %51 = sbr.rel (0) target = $region21
    $region20: #{tpu_custom_call.1} parent=1 // pred_region
      %53 = vsyncadd [#allocation4], 0
      %s54 = sshll.u32 [#allocation7], 4
      %s55 = int_to_ptr.vmem [resolvable:$true] %s54
      %s56 = sshll.u32 %s2, 4
      %s57 = int_to_ptr.hbm [resolvable:$true] %s56
      %62 = dma.vmem_to_hbm [thread:$0]  %s55, 256, %s57, [#allocation4], 128, 128, 8
    $region21: #{tpu_custom_call.1} parent=1 // pred_fallthru
      _
    // Predicated region
    $region22: #{tpu_custom_call.1} parent=1 // pred_check
      _
    $region23: #{tpu_custom_call.1} parent=1 // pred_check_branch
      %64 = sbr.rel (0) target = $region25
    $region24: #{tpu_custom_call.1} parent=1 // pred_region
      %66 = dma.done [#allocation4], 256
    $region25: #{tpu_custom_call.1} parent=1 // pred_fallthru
      _
    %67 = vsyncpa [#allocation3], 1
    %68 = vsyncpa [#allocation6], 1
    %69 = vsyncpa [#allocation4], 1

</llo_original>
